<compile_context>
chip_gen: v5e
topology: v5e:2x2
jax: 0.10.0
libtpu: 0.0.40
codegen_flags: <defaults>
</compile_context>

<pallas_src>
import functools
import math

import jax
import jax.numpy as jnp
from jax import lax
from jax.experimental import pallas as pl
from jax.experimental.pallas import tpu as pltpu


def _enough_attention_kernel(x_ref, wvt_ref, wtt_ref, o_ref, *, compute_dtype):
    """One grid step: a (Bt, n, d) batch tile against resident (d, d) weights."""
    bt, n, d = x_ref.shape
    x = x_ref[...]

    xm = x.astype(compute_dtype)
    wvt = wvt_ref[...].astype(compute_dtype)
    wtt = wtt_ref[...].astype(compute_dtype)

    # --- Projections (nn.Linear: y = x @ W.T; weights pre-transposed).
    # Flatten the batch tile into the MXU M dimension so small-n problems still
    # present a tall matmul; accumulate in f32.
    x_flat = xm.reshape(bt * n, d)
    xwv = jnp.dot(x_flat, wvt,
                  preferred_element_type=jnp.float32).reshape(bt, n, d)
    theta_x = jnp.dot(x_flat, wtt,
                      preferred_element_type=jnp.float32).reshape(bt, n, d)

    # --- first = (1/n) * ones(n,n) @ XW_v  ==  broadcast row-mean of XW_v,
    # taken directly from the f32 xwv (XLU reduction; no extra matmul, no
    # extra dtype round-trip).
    first = jnp.mean(xwv, axis=1, keepdims=True)                      # (bt,1,d)

    # --- second, reassociated (identical math, no (n,n) intermediate):
    #   scores @ XW_v = (X @ theta_X^T) @ XW_v = X @ (theta_X^T @ XW_v)
    # Per-batch Gram matrix via batched dot_general (contract the n axis).
    g = lax.dot_general(
        theta_x.astype(compute_dtype), xwv.astype(compute_dtype),
        dimension_numbers=(((1,), (1,)), ((0,), (0,))),
        preferred_element_type=jnp.float32)                           # (bt,d,d)
    # Fold 1/(n*sqrt(d)) into G while it is cast anyway (d^2 elems, not n*d).
    scale = 1.0 / (n * math.sqrt(d))
    g_scaled = (g * scale).astype(compute_dtype)
    second = lax.dot_general(
        xm, g_scaled,
        dimension_numbers=(((2,), (1,)), ((0,), (0,))),
        preferred_element_type=jnp.float32)                           # (bt,n,d)

    o_ref[...] = (first + second).astype(o_ref.dtype)


def _vmem_capacity_bytes():
    """Per-core VMEM capacity; conservative (v7x-sized) fallback if unknown."""
    try:
        info = pltpu.get_tpu_info()
        cap = getattr(info, "vmem_capacity_bytes", None)
        if cap:
            return int(cap)
    except Exception:
        pass
    return 64 << 20


def _block_bytes(bt, n, d, itemsize, weight_buffers):
    """Rough per-step VMEM footprint for a (bt, n, d) batch tile."""
    io = 2 * 2 * bt * n * d * itemsize              # x + out blocks, 2x pipelined
    w = weight_buffers * 2 * d * d * itemsize       # two resident (d,d) weights
    f32 = (3 * bt * n * d + 2 * bt * d * d + bt * d) * 4   # xwv/theta/second, G, mean
    return io + w + f32


def _pick_batch_tile(B, n, d, itemsize, budget_bytes, weight_buffers):
    """Largest divisor of B whose block fits the budget; keep grid extent >= 2."""
    divisors = [t for t in range(1, B + 1) if B % t == 0]
    fitting = [t for t in divisors
               if _block_bytes(t, n, d, itemsize, weight_buffers) <= budget_bytes]
    bt = fitting[-1] if fitting else 1
    # Keep the parallel grid extent >= 2 when possible so both v7x TensorCores
    # get work (a no-op on single-TC v5e/v6e).
    while bt > 1 and B // bt < 2:
        bt = max(t for t in divisors if t < bt)
    return bt


def multihead_enough_attention(x, w_v, w_theta, num_heads=None, *,
                               use_bf16_matmul=False):
    """x: (B, n, d); w_v, w_theta: (d, d) in nn.Linear layout -> (B, n, d).

    num_heads is accepted only for interface parity with the PyTorch module;
    its forward pass does not use it.
    """
    del num_heads
    B, n, d = x.shape
    itemsize = jnp.dtype(x.dtype).itemsize

    compute_dtype = x.dtype
    if use_bf16_matmul and jnp.dtype(x.dtype) == jnp.float32:
        # Native-rate MXU operands, f32 accumulation kept (loosens tolerances).
        compute_dtype = jnp.bfloat16

    # Pre-transpose weights once in the wrapper so the kernel never runs an
    # XLU transpose per grid step.
    wv_t = jnp.asarray(w_v).T
    wt_t = jnp.asarray(w_theta).T

    cap = _vmem_capacity_bytes()
    vmem_cap = (cap * 7) // 8            # ~56 MiB on v7x, ~112 MiB on v5e/v6e

    cost = pl.CostEstimate(
        flops=8 * B * n * d * d,
        transcendentals=0,
        bytes_accessed=2 * B * n * d * itemsize + 2 * d * d * itemsize,
    )
    kernel = functools.partial(_enough_attention_kernel,
                               compute_dtype=compute_dtype)

    def run(single_buffer_weights):
        weight_buffers = 1 if single_buffer_weights else 2
        bt = _pick_batch_tile(B, n, d, itemsize, (cap * 3) // 4, weight_buffers)
        est = _block_bytes(bt, n, d, itemsize, weight_buffers)
        vmem_limit = int(min(max(2 * est, 32 << 20), vmem_cap))

        w_spec_kwargs = {}
        if single_buffer_weights:
            # Grid-invariant index_map -> the second buffer is never used.
            w_spec_kwargs["pipeline_mode"] = pl.Buffered(1)

        return pl.pallas_call(
            kernel,
            out_shape=jax.ShapeDtypeStruct((B, n, d), x.dtype),
            grid_spec=pltpu.PrefetchScalarGridSpec(
                num_scalar_prefetch=0,
                grid=(B // bt,),
                in_specs=[
                    pl.BlockSpec((bt, n, d), lambda b: (b, 0, 0)),   # X batch tile
                    pl.BlockSpec((d, d), lambda b: (0, 0), **w_spec_kwargs),  # W_v.T
                    pl.BlockSpec((d, d), lambda b: (0, 0), **w_spec_kwargs),  # W_theta.T
                ],
                out_specs=pl.BlockSpec((bt, n, d), lambda b: (b, 0, 0)),
            ),
            compiler_params=pltpu.CompilerParams(
                dimension_semantics=("parallel",),
                vmem_limit_bytes=vmem_limit,
            ),
            cost_estimate=cost,
        )(x, wv_t, wt_t)

    try:
        return run(single_buffer_weights=True)
    except Exception:
        # Defensive: fall back to default double-buffered weight specs if this
        # jax build rejects pl.Buffered(1) on an input BlockSpec.
        return run(single_buffer_weights=False)


def _reference(x, w_v, w_theta):
    """Pure-JAX reference mirroring the PyTorch forward exactly (original order)."""
    B, n, d = x.shape
    xwv = jnp.einsum("bnd,ed->bne", x, w_v)            # X @ W_v.T
    theta_x = jnp.einsum("bnd,ed->bne", x, w_theta)    # X @ W_theta.T
    ones = jnp.ones((n, n), dtype=x.dtype)
    first = (1.0 / n) * jnp.einsum("ij,bjd->bid", ones, xwv)
    scores = jnp.einsum("bnd,bmd->bnm", x, theta_x)
    second = (1.0 / (n * math.sqrt(d))) * jnp.einsum("bnm,bmd->bnd", scores, xwv)
    return first + second


if __name__ == "__main__":
    key = jax.random.PRNGKey(0)
    k_x, k_wv, k_wt = jax.random.split(key, 3)

    B, n, d_model = 2, 8, 32
    num_heads = 4  # interface parity only; unused by the forward pass

    # Deterministic parameter init (nn.Linear default: U(-1/sqrt(d), 1/sqrt(d))).
    bound = 1.0 / math.sqrt(d_model)
    w_v = jax.random.uniform(k_wv, (d_model, d_model), jnp.float32, -bound, bound)
    w_theta = jax.random.uniform(k_wt, (d_model, d_model), jnp.float32, -bound, bound)

    x = jax.random.normal(k_x, (B, n, d_model), jnp.float32)

    out = multihead_enough_attention(x, w_v, w_theta, num_heads)
    out = jax.block_until_ready(out)

    ref = _reference(x, w_v, w_theta)
    assert out.shape == (B, n, d_model)
    assert jnp.allclose(out, ref, atol=1e-4, rtol=1e-4), "mismatch vs reference"

    print("KERNEL_OK")
</pallas_src>

<mosaic_0001>
module attributes {stable_mosaic.version = 11 : i64} {
  func.func @_enough_attention_kernel(%arg0: i32, %arg1: memref<1x8x32xf32, #tpu.memory_space<vmem>>, %arg2: memref<32x32xf32, #tpu.memory_space<vmem>>, %arg3: memref<32x32xf32, #tpu.memory_space<vmem>>, %arg4: memref<1x8x32xf32, #tpu.memory_space<vmem>>) attributes {dimension_semantics = [#tpu.dimension_semantics<parallel>], iteration_bounds = array<i64: 2>, scalar_prefetch = 0 : i64, scratch_operands = 0 : i64, tpu.core_type = #tpu.core_type<tc>, window_params = [{transform_indices = @transform_0, window_bounds = array<i64: 1, 8, 32>}, {pipeline_mode = #tpu.pipeline_mode<synchronous>, transform_indices = @transform_1, window_bounds = array<i64: 32, 32>}, {pipeline_mode = #tpu.pipeline_mode<synchronous>, transform_indices = @transform_2, window_bounds = array<i64: 32, 32>}, {transform_indices = @transform_3, window_bounds = array<i64: 1, 8, 32>}]} {
    %c0 = arith.constant 0 : index
    %c0_0 = arith.constant 0 : index
    %c0_1 = arith.constant 0 : index
    %0 = vector.load %arg1[%c0, %c0_0, %c0_1] : memref<1x8x32xf32, #tpu.memory_space<vmem>>, vector<1x8x32xf32>
    %c0_2 = arith.constant 0 : index
    %c0_3 = arith.constant 0 : index
    %1 = vector.load %arg2[%c0_2, %c0_3] : memref<32x32xf32, #tpu.memory_space<vmem>>, vector<32x32xf32>
    %c0_4 = arith.constant 0 : index
    %c0_5 = arith.constant 0 : index
    %2 = vector.load %arg3[%c0_4, %c0_5] : memref<32x32xf32, #tpu.memory_space<vmem>>, vector<32x32xf32>
    %3 = vector.shape_cast %0 : vector<1x8x32xf32> to vector<8x32xf32>
    %cst = arith.constant dense<0.000000e+00> : vector<8x32xf32>
    %4 = tpu.matmul %3, %1, %cst {dimension_numbers = #tpu.dot_dimension_numbers<[1], [0], [0], [1], [0, 0, 1, 1], [], []>} : vector<8x32xf32>, vector<32x32xf32>, vector<8x32xf32> -> vector<8x32xf32>
    %5 = vector.shape_cast %4 : vector<8x32xf32> to vector<1x8x32xf32>
    %cst_6 = arith.constant dense<0.000000e+00> : vector<8x32xf32>
    %6 = tpu.matmul %3, %2, %cst_6 {dimension_numbers = #tpu.dot_dimension_numbers<[1], [0], [0], [1], [0, 0, 1, 1], [], []>} : vector<8x32xf32>, vector<32x32xf32>, vector<8x32xf32> -> vector<8x32xf32>
    %7 = vector.shape_cast %6 : vector<8x32xf32> to vector<1x8x32xf32>
    %cst_7 = arith.constant dense<0.000000e+00> : vector<1x32xf32>
    %8 = vector.multi_reduction <add>, %5, %cst_7 [1] : vector<1x8x32xf32> to vector<1x32xf32>
    %9 = vector.shape_cast %8 : vector<1x32xf32> to vector<1x1x32xf32>
    %cst_8 = arith.constant 8.000000e+00 : f32
    %10 = vector.broadcast %cst_8 : f32 to vector<1x1x32xf32>
    %11 = arith.divf %9, %10 : vector<1x1x32xf32>
    %cst_9 = arith.constant dense<0.000000e+00> : vector<1x32x32xf32>
    %12 = tpu.matmul %7, %5, %cst_9 {dimension_numbers = #tpu.dot_dimension_numbers<[1], [1], [2], [2], [0, 0, 0, 2, 1, 2], [0], [0]>} : vector<1x8x32xf32>, vector<1x8x32xf32>, vector<1x32x32xf32> -> vector<1x32x32xf32>
    %cst_10 = arith.constant 0.0220970865 : f32
    %13 = vector.broadcast %cst_10 : f32 to vector<1x32x32xf32>
    %14 = arith.mulf %12, %13 : vector<1x32x32xf32>
    %cst_11 = arith.constant dense<0.000000e+00> : vector<1x8x32xf32>
    %15 = tpu.matmul %0, %14, %cst_11 {dimension_numbers = #tpu.dot_dimension_numbers<[2], [1], [1], [2], [0, 0, 0, 1, 1, 2], [0], [0]>} : vector<1x8x32xf32>, vector<1x32x32xf32>, vector<1x8x32xf32> -> vector<1x8x32xf32>
    %16 = vector.broadcast %11 : vector<1x1x32xf32> to vector<1x8x32xf32>
    %17 = arith.addf %16, %15 : vector<1x8x32xf32>
    %c0_12 = arith.constant 0 : index
    %c0_13 = arith.constant 0 : index
    %c0_14 = arith.constant 0 : index
    %18 = vector.load %arg4[%c0_12, %c0_13, %c0_14] : memref<1x8x32xf32, #tpu.memory_space<vmem>>, vector<1x8x32xf32>
    tpu.vector_store %arg4[%c0_12, %c0_13, %c0_14], %17 {strides = array<i32>} : memref<1x8x32xf32, #tpu.memory_space<vmem>>, vector<1x8x32xf32>,
    return
  }
  func.func @transform_0(%arg0: i32) -> (i32, i32, i32) {
    %c0_i32 = arith.constant 0 : i32
    %c0_i32_0 = arith.constant 0 : i32
    %c0_i32_1 = arith.constant 0 : i32
    return %arg0, %c0_i32, %c0_i32_0 : i32, i32, i32
  }
  func.func @transform_1(%arg0: i32) -> (i32, i32) {
    %c0_i32 = arith.constant 0 : i32
    %c0_i32_0 = arith.constant 0 : i32
    %c0_i32_1 = arith.constant 0 : i32
    return %c0_i32, %c0_i32_0 : i32, i32
  }
  func.func @transform_2(%arg0: i32) -> (i32, i32) {
    %c0_i32 = arith.constant 0 : i32
    %c0_i32_0 = arith.constant 0 : i32
    %c0_i32_1 = arith.constant 0 : i32
    return %c0_i32, %c0_i32_0 : i32, i32
  }
  func.func @transform_3(%arg0: i32) -> (i32, i32, i32) {
    %c0_i32 = arith.constant 0 : i32
    %c0_i32_0 = arith.constant 0 : i32
    %c0_i32_1 = arith.constant 0 : i32
    return %arg0, %c0_i32, %c0_i32_0 : i32, i32, i32
  }
}

module attributes {stable_mosaic.version = 11 : i64} {
  func.func @_enough_attention_kernel(%arg0: i32, %arg1: memref<1x8x32xf32, #tpu.memory_space<vmem>>, %arg2: memref<32x32xf32, #tpu.memory_space<vmem>>, %arg3: memref<32x32xf32, #tpu.memory_space<vmem>>, %arg4: memref<1x8x32xf32, #tpu.memory_space<vmem>>) attributes {dimension_semantics = [#tpu.dimension_semantics<parallel>], iteration_bounds = array<i64: 2>, scalar_prefetch = 0 : i64, scratch_operands = 0 : i64, tpu.core_type = #tpu.core_type<tc>, window_params = [{transform_indices = @transform_0, window_bounds = array<i64: 1, 8, 32>}, {pipeline_mode = #tpu.pipeline_mode<synchronous>, transform_indices = @transform_1, window_bounds = array<i64: 32, 32>}, {pipeline_mode = #tpu.pipeline_mode<synchronous>, transform_indices = @transform_2, window_bounds = array<i64: 32, 32>}, {transform_indices = @transform_3, window_bounds = array<i64: 1, 8, 32>}]} {
    %c0 = arith.constant 0 : index
    %c0_0 = arith.constant 0 : index
    %c0_1 = arith.constant 0 : index
    %0 = vector.load %arg1[%c0, %c0_0, %c0_1] : memref<1x8x32xf32, #tpu.memory_space<vmem>>, vector<1x8x32xf32>
    %c0_2 = arith.constant 0 : index
    %c0_3 = arith.constant 0 : index
    %1 = vector.load %arg2[%c0_2, %c0_3] : memref<32x32xf32, #tpu.memory_space<vmem>>, vector<32x32xf32>
    %c0_4 = arith.constant 0 : index
    %c0_5 = arith.constant 0 : index
    %2 = vector.load %arg3[%c0_4, %c0_5] : memref<32x32xf32, #tpu.memory_space<vmem>>, vector<32x32xf32>
    %3 = vector.shape_cast %0 : vector<1x8x32xf32> to vector<8x32xf32>
    %cst = arith.constant dense<0.000000e+00> : vector<8x32xf32>
    %4 = tpu.matmul %3, %1, %cst {dimension_numbers = #tpu.dot_dimension_numbers<[1], [0], [0], [1], [0, 0, 1, 1], [], []>} : vector<8x32xf32>, vector<32x32xf32>, vector<8x32xf32> -> vector<8x32xf32>
    %5 = vector.shape_cast %4 : vector<8x32xf32> to vector<1x8x32xf32>
    %cst_6 = arith.constant dense<0.000000e+00> : vector<8x32xf32>
    %6 = tpu.matmul %3, %2, %cst_6 {dimension_numbers = #tpu.dot_dimension_numbers<[1], [0], [0], [1], [0, 0, 1, 1], [], []>} : vector<8x32xf32>, vector<32x32xf32>, vector<8x32xf32> -> vector<8x32xf32>
    %7 = vector.shape_cast %6 : vector<8x32xf32> to vector<1x8x32xf32>
    %cst_7 = arith.constant dense<0.000000e+00> : vector<1x32xf32>
    %8 = vector.multi_reduction <add>, %5, %cst_7 [1] : vector<1x8x32xf32> to vector<1x32xf32>
    %9 = vector.shape_cast %8 : vector<1x32xf32> to vector<1x1x32xf32>
    %cst_8 = arith.constant 8.000000e+00 : f32
    %10 = vector.broadcast %cst_8 : f32 to vector<1x1x32xf32>
    %11 = arith.divf %9, %10 : vector<1x1x32xf32>
    %cst_9 = arith.constant dense<0.000000e+00> : vector<1x32x32xf32>
    %12 = tpu.matmul %7, %5, %cst_9 {dimension_numbers = #tpu.dot_dimension_numbers<[1], [1], [2], [2], [0, 0, 0, 2, 1, 2], [0], [0]>} : vector<1x8x32xf32>, vector<1x8x32xf32>, vector<1x32x32xf32> -> vector<1x32x32xf32>
    %cst_10 = arith.constant 0.0220970865 : f32
    %13 = vector.broadcast %cst_10 : f32 to vector<1x32x32xf32>
    %14 = arith.mulf %12, %13 : vector<1x32x32xf32>
    %cst_11 = arith.constant dense<0.000000e+00> : vector<1x8x32xf32>
    %15 = tpu.matmul %0, %14, %cst_11 {dimension_numbers = #tpu.dot_dimension_numbers<[2], [1], [1], [2], [0, 0, 0, 1, 1, 2], [0], [0]>} : vector<1x8x32xf32>, vector<1x32x32xf32>, vector<1x8x32xf32> -> vector<1x8x32xf32>
    %16 = vector.broadcast %11 : vector<1x1x32xf32> to vector<1x8x32xf32>
    %17 = arith.addf %16, %15 : vector<1x8x32xf32>
    %c0_12 = arith.constant 0 : index
    %c0_13 = arith.constant 0 : index
    %c0_14 = arith.constant 0 : index
    %18 = vector.load %arg4[%c0_12, %c0_13, %c0_14] : memref<1x8x32xf32, #tpu.memory_space<vmem>>, vector<1x8x32xf32>
    tpu.vector_store %arg4[%c0_12, %c0_13, %c0_14], %17 {strides = array<i32>} : memref<1x8x32xf32, #tpu.memory_space<vmem>>, vector<1x8x32xf32>,
    return
  }
  func.func @transform_0(%arg0: i32) -> (i32, i32, i32) {
    %c0_i32 = arith.constant 0 : i32
    %c0_i32_0 = arith.constant 0 : i32
    %c0_i32_1 = arith.constant 0 : i32
    return %arg0, %c0_i32, %c0_i32_0 : i32, i32, i32
  }
  func.func @transform_1(%arg0: i32) -> (i32, i32) {
    %c0_i32 = arith.constant 0 : i32
    %c0_i32_0 = arith.constant 0 : i32
    %c0_i32_1 = arith.constant 0 : i32
    return %c0_i32, %c0_i32_0 : i32, i32
  }
  func.func @transform_2(%arg0: i32) -> (i32, i32) {
    %c0_i32 = arith.constant 0 : i32
    %c0_i32_0 = arith.constant 0 : i32
    %c0_i32_1 = arith.constant 0 : i32
    return %c0_i32, %c0_i32_0 : i32, i32
  }
  func.func @transform_3(%arg0: i32) -> (i32, i32, i32) {
    %c0_i32 = arith.constant 0 : i32
    %c0_i32_0 = arith.constant 0 : i32
    %c0_i32_1 = arith.constant 0 : i32
    return %arg0, %c0_i32, %c0_i32_0 : i32, i32, i32
  }
}

</mosaic_0001>

<llo_original>
// kernel: tpu_custom_call.1
$region0: #{tpu_custom_call.1}
  #allocation0 [shape = 'u32[]', space=smem, size = 0x4, offset = 0x4, fixed_abs, tag = 'smem constant byte address 0x4 - core index']
  #allocation1 [shape = 'u32[72,128]{1,0:T(1,128)}', space=vmem, size = 0x9000, scoped, tag = 'internal scratch']
  %s0 = inlined_call_operand.hbm [shape: f32[2,8,32], index: 0, kind: input, shape index: {}]
  %s1 = inlined_call_operand.hbm [shape: f32[32,32], index: 1, kind: input, shape index: {}]
  %s2 = inlined_call_operand.hbm [shape: f32[32,32], index: 2, kind: input, shape index: {}]
  %s3 = inlined_call_operand.hbm [shape: f32[2,8,32], index: 3, kind: output, shape index: {}]
  %s4 = sld [smem:[#allocation0]]
  $region57: #{tpu_custom_call.1} parent=0
    _
  %s6 = ssub.s32 1, %s4
  %s7 = scalar_select 0, %s6, %s4
  $region1: #{tpu_custom_call.1} parent=0
    #allocation2 [shape = 'u8[8192]{0}', space=vmem, size = 0x2000, scoped, tag = 'input window, operand 0']
    #allocation3 [shape = 's32[2]{0}', space=sflag, size = 0x8, scoped, tag = 'scoped memory for tpu_custom_call.1']
    #allocation4 [shape = 's32[2]{0}', space=sflag, size = 0x8, scoped, tag = 'scoped memory for tpu_custom_call.1']
    #allocation5 [shape = 'u8[16384]{0}', space=vmem, size = 0x4000, scoped, tag = 'input window, operand 1, single buffered']
    #allocation6 [shape = 's32[1]{0}', space=sflag, size = 0x4, scoped, tag = 'scoped memory for tpu_custom_call.1']
    #allocation7 [shape = 'u8[16384]{0}', space=vmem, size = 0x4000, scoped, tag = 'input window, operand 2, single buffered']
    #allocation8 [shape = 'u8[8192]{0}', space=vmem, size = 0x2000, scoped, tag = 'output window, operand 0']
    %8 = vsyncpa [#allocation3], 0
    %s9 = scalar_lea.sflag [#allocation3], 1
    %10 = vsyncpa %s9, 0
    %11 = vsyncpa [#allocation6], 0
    %12 = vsyncpa [#allocation4], 0
    %s13 = scalar_lea.sflag [#allocation4], 1
    %14 = vsyncpa %s13, 0
    loop: start=0, step=1, limit=4
    $region2: #{tpu_custom_call.1} parent=1 // loop_pre_header
      _
    $region3: #{tpu_custom_call.1} parent=1 // loop_header
      %s16 = sphi 0, %s20
      %p17 = scmp.ge.s32.totalorder %s16, 4
      %s26 = sphi 0, %s28
      %s29 = sphi 0, %s26
      %s30 = sphi 0, %s29
      %s46 = sphi 0, %s30
      %s50 = sphi 0, %s50
      %s52 = sphi 0, %s50
      %s53 = sphi 0, %s52
      %s67 = sphi 0, %s53
      %s71 = sphi 0, %s71
      %s73 = sphi 0, %s71
      %s74 = sphi 0, %s73
      %s88 = sphi 0, %s74
      %s94 = sphi 0, %s96
      %s97 = sphi 0, %s94
      %s98 = sphi 0, %s97
      %s114 = sphi 0, %s98
    $region4: #{tpu_custom_call.1} parent=1 // loop_header_branch
      %19 = sbr.rel (%p17) target = $region8
    $region5: #{tpu_custom_call.1} parent=1 // loop_body
      %s21 = ssub.s32 %s16, 1
      %s22 = ssub.s32 %s16, 2
      %s23 = sadd.s32 %s16, 1
      %s24 = ssub.s32 %s16, %s23
      %p25 = scmp.eq.s32.totalorder %s24, 0
      %s27 = sadd.s32 %s26, 1
      %s28 = scalar_select %p25, %s26, %s27
      %p31 = pneg %p25
      %p32 = scmp.eq.s32.totalorder %s16, 1
      %p33 = por %p31, %p32
      %p34 = scmp.ne.s32.totalorder %s26, %s29
      %p35 = scmp.eq.s32.totalorder %s16, 0
      %p36 = por %p34, %p35
      %p37 = scmp.ne.s32.totalorder %s26, %s29
      %p38 = scmp.eq.s32.totalorder %s21, 1
      %p39 = por %p37, %p38
      %p40 = scmp.ne.s32.totalorder %s29, %s30
      %p41 = scmp.eq.s32.totalorder %s21, 0
      %p42 = por %p40, %p41
      %p43 = scmp.ne.s32.totalorder %s29, %s30
      %p44 = scmp.eq.s32.totalorder %s22, 1
      %p45 = por %p43, %p44
      %p47 = scmp.ne.s32.totalorder %s30, %s46
      %p48 = scmp.eq.s32.totalorder %s22, 0
      %p49 = por %p47, %p48
      %s51 = sadd.s32 %s50, 1
      %p54 = scmp.eq.s32.totalorder %s16, 1
      %p55 = scmp.ne.s32.totalorder %s50, %s52
      %p56 = scmp.eq.s32.totalorder %s16, 0
      %p57 = por %p55, %p56
      %p58 = scmp.ne.s32.totalorder %s50, %s52
      %p59 = scmp.eq.s32.totalorder %s21, 1
      %p60 = por %p58, %p59
      %p61 = scmp.ne.s32.totalorder %s52, %s53
      %p62 = scmp.eq.s32.totalorder %s21, 0
      %p63 = por %p61, %p62
      %p64 = scmp.ne.s32.totalorder %s52, %s53
      %p65 = scmp.eq.s32.totalorder %s22, 1
      %p66 = por %p64, %p65
      %p68 = scmp.ne.s32.totalorder %s53, %s67
      %p69 = scmp.eq.s32.totalorder %s22, 0
      %p70 = por %p68, %p69
      %s72 = sadd.s32 %s71, 1
      %p75 = scmp.eq.s32.totalorder %s16, 1
      %p76 = scmp.ne.s32.totalorder %s71, %s73
      %p77 = scmp.eq.s32.totalorder %s16, 0
      %p78 = por %p76, %p77
      %p79 = scmp.ne.s32.totalorder %s71, %s73
      %p80 = scmp.eq.s32.totalorder %s21, 1
      %p81 = por %p79, %p80
      %p82 = scmp.ne.s32.totalorder %s73, %s74
      %p83 = scmp.eq.s32.totalorder %s21, 0
      %p84 = por %p82, %p83
      %p85 = scmp.ne.s32.totalorder %s73, %s74
      %p86 = scmp.eq.s32.totalorder %s22, 1
      %p87 = por %p85, %p86
      %p89 = scmp.ne.s32.totalorder %s74, %s88
      %p90 = scmp.eq.s32.totalorder %s22, 0
      %p91 = por %p89, %p90
      %s92 = ssub.s32 %s16, %s23
      %p93 = scmp.eq.s32.totalorder %s92, 0
      %s95 = sadd.s32 %s94, 1
      %s96 = scalar_select %p93, %s94, %s95
      %p99 = pneg %p93
      %p100 = scmp.eq.s32.totalorder %s16, 1
      %p101 = por %p99, %p100
      %p102 = scmp.ne.s32.totalorder %s94, %s97
      %p103 = scmp.eq.s32.totalorder %s16, 0
      %p104 = por %p102, %p103
      %p105 = scmp.ne.s32.totalorder %s94, %s97
      %p106 = scmp.eq.s32.totalorder %s21, 1
      %p107 = por %p105, %p106
      %p108 = scmp.ne.s32.totalorder %s97, %s98
      %p109 = scmp.eq.s32.totalorder %s21, 0
      %p110 = por %p108, %p109
      %p111 = scmp.ne.s32.totalorder %s97, %s98
      %p112 = scmp.eq.s32.totalorder %s22, 1
      %p113 = por %p111, %p112
      %p115 = scmp.ne.s32.totalorder %s98, %s114
      %p116 = scmp.eq.s32.totalorder %s22, 0
      %p117 = por %p115, %p116
      %p118 = scmp.le.s32.totalorder 1, %s16
      %p119 = scmp.lt.s32.totalorder %s16, 3
      %p120 = pnand %p118, %p119
      %p121 = pneg %p120
      // Predicated region
      $region9: #{tpu_custom_call.1} parent=5 // pred_check
        _
      $region10: #{tpu_custom_call.1} parent=5 // pred_check_branch
        %123 = sbr.rel (%p120) target = $region12
      $region11: #{tpu_custom_call.1} parent=5 // pred_region
        %s124 = ssub.s32 %s16, 1
        // Predicated region
        $region13: #{tpu_custom_call.1} parent=11 // pred_check
          %p125 = pneg %p63
        $region14: #{tpu_custom_call.1} parent=11 // pred_check_branch
          %127 = sbr.rel (%p125) target = $region16
        $region15: #{tpu_custom_call.1} parent=11 // pred_region
          %129 = vsyncadd [#allocation6], 0
          %s130 = sshll.u32 %s1, 4
          %s131 = int_to_ptr.hbm [resolvable:$true] %s130
          %s132 = sshll.u32 [#allocation5], 4
          %s133 = int_to_ptr.vmem [resolvable:$true] %s132
          %138 = dma.hbm_to_vmem [thread:$0]  %s131, 512, %s133, [#allocation6], 128, 128, 8
        $region16: #{tpu_custom_call.1} parent=11 // pred_fallthru
          _
        // Predicated region
        $region17: #{tpu_custom_call.1} parent=11 // pred_check
          %p139 = pneg %p84
        $region18: #{tpu_custom_call.1} parent=11 // pred_check_branch
          %141 = sbr.rel (%p139) target = $region20
        $region19: #{tpu_custom_call.1} parent=11 // pred_region
          %143 = vsyncadd [#allocation6], 0
          %s144 = sshll.u32 %s2, 4
          %s145 = int_to_ptr.hbm [resolvable:$true] %s144
          %s146 = sshll.u32 [#allocation7], 4
          %s147 = int_to_ptr.vmem [resolvable:$true] %s146
          %152 = dma.hbm_to_vmem [thread:$0]  %s145, 512, %s147, [#allocation6], 128, 128, 8
        $region20: #{tpu_custom_call.1} parent=11 // pred_fallthru
          _
      $region12: #{tpu_custom_call.1} parent=5 // pred_fallthru
        _
      %p153 = scmp.lt.s32.totalorder %s16, 2
      // Predicated region
      $region21: #{tpu_custom_call.1} parent=5 // pred_check
        %p154 = pneg %p153
      $region22: #{tpu_custom_call.1} parent=5 // pred_check_branch
        %156 = sbr.rel (%p154) target = $region24
      $region23: #{tpu_custom_call.1} parent=5 // pred_region
        // Predicated region
        $region25: #{tpu_custom_call.1} parent=23 // pred_check
          %p157 = pneg %p36
        $region26: #{tpu_custom_call.1} parent=23 // pred_check_branch
          %159 = sbr.rel (%p157) target = $region28
        $region27: #{tpu_custom_call.1} parent=23 // pred_region
          %s160 = sand.u32 %s26, 1
          %s161 = scalar_lea.sflag [#allocation3], %s160
          %s162 = sand.u32 %s26, 1
          %s163 = smul.addr %s162, 8
          %s164 = scalar_lea.vmem [#allocation2], %s163
          %166 = vsyncadd %s161, 0
          %s167 = smul.addr %s16, 8
          %s168 = scalar_lea.hbm %s0, %s167
          %s170 = sshll.u32 %s168, 4
          %s171 = int_to_ptr.hbm [resolvable:$true] %s170
          %s172 = sshll.u32 %s164, 4
          %s173 = int_to_ptr.vmem [resolvable:$true] %s172
          %175 = dma.hbm_to_vmem [thread:$0]  %s171, 128, %s173, %s161
        $region28: #{tpu_custom_call.1} parent=23 // pred_fallthru
          _
      $region24: #{tpu_custom_call.1} parent=5 // pred_fallthru
        _
      %p176 = scmp.le.s32.totalorder 1, %s16
      %p177 = scmp.lt.s32.totalorder %s16, 3
      %p178 = pnand %p176, %p177
      %p179 = pneg %p178
      // Predicated region
      $region29: #{tpu_custom_call.1} parent=5 // pred_check
        _
      $region30: #{tpu_custom_call.1} parent=5 // pred_check_branch
        %181 = sbr.rel (%p178) target = $region32
      $region31: #{tpu_custom_call.1} parent=5 // pred_region
        %s182 = ssub.s32 %s16, 1
        %s183 = sand.u32 %s29, 1
        %s184 = scalar_lea.sflag [#allocation3], %s183
        %s185 = sand.u32 %s29, 1
        %s186 = smul.addr %s185, 8
        %s187 = scalar_lea.vmem [#allocation2], %s186
        // Predicated region
        $region33: #{tpu_custom_call.1} parent=31 // pred_check
          %p188 = pneg %p42
        $region34: #{tpu_custom_call.1} parent=31 // pred_check_branch
          %190 = sbr.rel (%p188) target = $region36
        $region35: #{tpu_custom_call.1} parent=31 // pred_region
          %192 = dma.done %s184, 128
        $region36: #{tpu_custom_call.1} parent=31 // pred_fallthru
          _
        // Predicated region
        $region37: #{tpu_custom_call.1} parent=31 // pred_check
          %p193 = pneg %p63
        $region38: #{tpu_custom_call.1} parent=31 // pred_check_branch
          %195 = sbr.rel (%p193) target = $region40
        $region39: #{tpu_custom_call.1} parent=31 // pred_region
          %197 = dma.done [#allocation6], 512
        $region40: #{tpu_custom_call.1} parent=31 // pred_fallthru
          _
        // Predicated region
        $region41: #{tpu_custom_call.1} parent=31 // pred_check
          %p198 = pneg %p84
        $region42: #{tpu_custom_call.1} parent=31 // pred_check_branch
          %200 = sbr.rel (%p198) target = $region44
        $region43: #{tpu_custom_call.1} parent=31 // pred_region
          %202 = dma.done [#allocation6], 512
        $region44: #{tpu_custom_call.1} parent=31 // pred_fallthru
          _
        %s203 = sand.u32 %s29, 1
        %s204 = scalar_lea.sflag [#allocation3], %s203
        %s205 = sand.u32 %s29, 1
        %s206 = smul.addr %s205, 8
        %s207 = scalar_lea.vmem [#allocation2], %s206
        %p208 = pneg %p42
        %p209 = pneg %p39
        %p210 = pneg %p63
        %p211 = pneg %p60
        %p212 = pneg %p84
        %p213 = pneg %p81
        %p214 = pneg %p110
        %p215 = pneg %p107
        %s216 = sand.u32 %s97, 1
        %s217 = scalar_lea.sflag [#allocation4], %s216
        %s218 = sand.u32 %s97, 1
        %s219 = smul.addr %s218, 8
        %s220 = scalar_lea.vmem [#allocation8], %s219
        %v221 = vld [vmem:[%s187] sm:$0xff]
        %v222 = vld [vmem:[#allocation5] sm:$0xff]
        %v223 = vld [vmem:[#allocation5 + $0x8] sm:$0xff]
        %v224 = vld [vmem:[#allocation5 + $0x10] sm:$0xff]
        %v225 = vld [vmem:[#allocation5 + $0x18] sm:$0xff]
        %v226 = vld [vmem:[#allocation7] sm:$0xff]
        %v227 = vld [vmem:[#allocation7 + $0x8] sm:$0xff]
        %v228 = vld [vmem:[#allocation7 + $0x10] sm:$0xff]
        %v229 = vld [vmem:[#allocation7 + $0x18] sm:$0xff]
        %vm230 = vcmask 261120
        %v232 = vsel %vm230, %v221, 0
        %234 = vmatpush.msra.mxu0 0.0
        %235 = vmatpush.msra.mxu0 0.0
        %236 = vmatpush.msra.mxu0 0.0
        %237 = vmatpush.msra.mxu0 0.0
        %238 = vmatpush.msra.mxu0 0.0
        %239 = vmatpush.msra.mxu0 0.0
        %240 = vmatpush.msra.mxu0 0.0
        %241 = vmatpush.msra.mxu0 0.0
        %242 = vmatpush.msra.mxu0 0.0
        %243 = vmatpush.msra.mxu0 0.0
        %244 = vmatpush.msra.mxu0 0.0
        %245 = vmatpush.msra.mxu0 0.0
        %246 = vmatpush.msra.mxu0 %v225
        %247 = vmatpush.msra.mxu0 %v224
        %248 = vmatpush.msra.mxu0 %v223
        %249 = vmatpush.msra.mxu0 %v222
        %250 = vmatmul.f32.gmra.mxu0 %v232
        %v251 = vpop.f32.mrf.mxu0
        %v252 = vadd.f32 0.0, %v251
        %253 = vdwg.mxu0
        %254 = vmatpush.msra.mxu0 0.0
        %255 = vmatpush.msra.mxu0 0.0
        %256 = vmatpush.msra.mxu0 0.0
        %257 = vmatpush.msra.mxu0 0.0
        %258 = vmatpush.msra.mxu0 0.0
        %259 = vmatpush.msra.mxu0 0.0
        %260 = vmatpush.msra.mxu0 0.0
        %261 = vmatpush.msra.mxu0 0.0
        %262 = vmatpush.msra.mxu0 0.0
        %263 = vmatpush.msra.mxu0 0.0
        %264 = vmatpush.msra.mxu0 0.0
        %265 = vmatpush.msra.mxu0 0.0
        %266 = vmatpush.msra.mxu0 %v229
        %267 = vmatpush.msra.mxu0 %v228
        %268 = vmatpush.msra.mxu0 %v227
        %269 = vmatpush.msra.mxu0 %v226
        %270 = vmatmul.f32.gmra.mxu0 %v232
        %v271 = vpop.f32.mrf.mxu0
        %v272 = vadd.f32 0.0, %v271
        %273 = vdwg.mxu0
        %v274 = vsel %vm230, %v252, 0.0
        %v275 = vrot.slane %v274, 4
        %v276 = vadd.f32 %v274, %v275
        %v277 = vrot.slane %v276, 2
        %v278 = vadd.f32 %v276, %v277
        %v279 = vrot.slane %v278, 1
        %v280 = vadd.f32 %v278, %v279
        %v281 = vrcp.pop 8.0
        %v282 = vmul.f32 8.0, %v281
        %v283 = vsub.f32 1.0, %v282
        %v284 = vmul.f32 %v281, %v283
        %v285 = vadd.f32 %v281, %v284
        %vm286 = vweird.f32 %v281
        %v287 = vsel %vm286, %v281, %v285
        %v288 = vmul.f32 %v280, %v287
        %289 = vxpose.xlu0.b32.start [1/16] %v272, 128
        %290 = vxpose.xlu0.b32.cont [2/16] 0.0, 128
        %291 = vxpose.xlu0.b32.cont [3/16] 0.0, 128
        %292 = vxpose.xlu0.b32.cont [4/16] 0.0, 128
        %293 = vxpose.xlu0.b32.cont [5/16] 0.0, 128
        %294 = vxpose.xlu0.b32.cont [6/16] 0.0, 128
        %295 = vxpose.xlu0.b32.cont [7/16] 0.0, 128
        %296 = vxpose.xlu0.b32.cont [8/16] 0.0, 128
        %297 = vxpose.xlu0.b32.cont [9/16] 0.0, 128
        %298 = vxpose.xlu0.b32.cont [10/16] 0.0, 128
        %299 = vxpose.xlu0.b32.cont [11/16] 0.0, 128
        %300 = vxpose.xlu0.b32.cont [12/16] 0.0, 128
        %301 = vxpose.xlu0.b32.cont [13/16] 0.0, 128
        %302 = vxpose.xlu0.b32.cont [14/16] 0.0, 128
        %303 = vxpose.xlu0.b32.cont [15/16] 0.0, 128
        %304 = vxpose.xlu0.b32.end [16/16] 0.0, 128
        %v305 = vpop.trf.xlu0
        %v306 = vpop.trf.xlu0
        %v307 = vpop.trf.xlu0
        %v308 = vpop.trf.xlu0
        %v309 = vpop.trf.xlu0
        %v310 = vpop.trf.xlu0
        %v311 = vpop.trf.xlu0
        %v312 = vpop.trf.xlu0
        %v313 = vpop.trf.xlu0
        %v314 = vpop.trf.xlu0
        %v315 = vpop.trf.xlu0
        %v316 = vpop.trf.xlu0
        %v317 = vpop.trf.xlu0
        %v318 = vpop.trf.xlu0
        %v319 = vpop.trf.xlu0
        %v320 = vpop.trf.xlu0
        %vm321 = vcmask 64512
        %v323 = vsel %vm321, %v305, 0
        %v326 = vsel %vm321, %v306, 0
        %v329 = vsel %vm321, %v307, 0
        %v332 = vsel %vm321, %v308, 0
        %334 = vmatpush.msra.mxu0 0.0
        %335 = vmatpush.msra.mxu0 0.0
        %336 = vmatpush.msra.mxu0 0.0
        %337 = vmatpush.msra.mxu0 0.0
        %338 = vmatpush.msra.mxu0 0.0
        %339 = vmatpush.msra.mxu0 0.0
        %340 = vmatpush.msra.mxu0 0.0
        %341 = vmatpush.msra.mxu0 0.0
        %342 = vmatpush.msra.mxu0 0.0
        %343 = vmatpush.msra.mxu0 0.0
        %344 = vmatpush.msra.mxu0 0.0
        %345 = vmatpush.msra.mxu0 0.0
        %346 = vmatpush.msra.mxu0 0.0
        %347 = vmatpush.msra.mxu0 0.0
        %348 = vmatpush.msra.mxu0 0.0
        %349 = vmatpush.msra.mxu0 %v252
        %350 = vmatmul.f32.gmra.mxu0 %v323
        %v351 = vpop.f32.mrf.mxu0
        %v352 = vadd.f32 0.0, %v351
        %353 = vmatmul.f32.gmra.mxu0 %v326
        %v354 = vpop.f32.mrf.mxu0
        %v355 = vadd.f32 0.0, %v354
        %356 = vmatmul.f32.gmra.mxu0 %v329
        %v357 = vpop.f32.mrf.mxu0
        %v358 = vadd.f32 0.0, %v357
        %359 = vmatmul.f32.gmra.mxu0 %v332
        %v360 = vpop.f32.mrf.mxu0
        %v361 = vadd.f32 0.0, %v360
        %362 = vdwg.mxu0
        %v363 = vmul.f32 %v352, 0.022097087
        %v364 = vmul.f32 %v355, 0.022097087
        %v365 = vmul.f32 %v358, 0.022097087
        %v366 = vmul.f32 %v361, 0.022097087
        %367 = vmatpush.msra.mxu0 0.0
        %368 = vmatpush.msra.mxu0 0.0
        %369 = vmatpush.msra.mxu0 0.0
        %370 = vmatpush.msra.mxu0 0.0
        %371 = vmatpush.msra.mxu0 0.0
        %372 = vmatpush.msra.mxu0 0.0
        %373 = vmatpush.msra.mxu0 0.0
        %374 = vmatpush.msra.mxu0 0.0
        %375 = vmatpush.msra.mxu0 0.0
        %376 = vmatpush.msra.mxu0 0.0
        %377 = vmatpush.msra.mxu0 0.0
        %378 = vmatpush.msra.mxu0 0.0
        %379 = vmatpush.msra.mxu0 %v366
        %380 = vmatpush.msra.mxu0 %v365
        %381 = vmatpush.msra.mxu0 %v364
        %382 = vmatpush.msra.mxu0 %v363
        %383 = vmatmul.f32.gmra.mxu0 %v232
        %v384 = vpop.f32.mrf.mxu0
        %v385 = vadd.f32 0.0, %v384
        %386 = vdwg.mxu0
        %v387 = vadd.f32 %v288, %v385
        %388 = vst.msk [vmem:[%s220] sm:$0xff] %vm230, %v387
        %s389 = sand.u32 %s97, 1
        %s390 = scalar_lea.sflag [#allocation4], %s389
        %s391 = sand.u32 %s97, 1
        %s392 = smul.addr %s391, 8
        %s393 = scalar_lea.vmem [#allocation8], %s392
        // Predicated region
        $region45: #{tpu_custom_call.1} parent=31 // pred_check
          %p394 = pneg %p107
        $region46: #{tpu_custom_call.1} parent=31 // pred_check_branch
          %396 = sbr.rel (%p394) target = $region48
        $region47: #{tpu_custom_call.1} parent=31 // pred_region
          %398 = vsyncadd %s390, 0
          %s399 = smul.addr %s21, 8
          %s400 = scalar_lea.hbm %s3, %s399
          %s402 = sshll.u32 %s393, 4
          %s403 = int_to_ptr.vmem [resolvable:$true] %s402
          %s404 = sshll.u32 %s400, 4
          %s405 = int_to_ptr.hbm [resolvable:$true] %s404
          %407 = dma.vmem_to_hbm [thread:$0]  %s403, 128, %s405, %s390
        $region48: #{tpu_custom_call.1} parent=31 // pred_fallthru
          _
      $region32: #{tpu_custom_call.1} parent=5 // pred_fallthru
        _
      %p408 = scmp.le.s32.totalorder 2, %s16
      // Predicated region
      $region49: #{tpu_custom_call.1} parent=5 // pred_check
        %p409 = pneg %p408
      $region50: #{tpu_custom_call.1} parent=5 // pred_check_branch
        %411 = sbr.rel (%p409) target = $region52
      $region51: #{tpu_custom_call.1} parent=5 // pred_region
        %s412 = ssub.s32 %s16, 2
        // Predicated region
        $region53: #{tpu_custom_call.1} parent=51 // pred_check
          %p413 = pneg %p113
        $region54: #{tpu_custom_call.1} parent=51 // pred_check_branch
          %415 = sbr.rel (%p413) target = $region56
        $region55: #{tpu_custom_call.1} parent=51 // pred_region
          %s416 = sand.u32 %s98, 1
          %s417 = scalar_lea.sflag [#allocation4], %s416
          %s418 = sand.u32 %s98, 1
          %s419 = smul.addr %s418, 8
          %s420 = scalar_lea.vmem [#allocation8], %s419
          %422 = dma.done %s417, 128
        $region56: #{tpu_custom_call.1} parent=51 // pred_fallthru
          _
      $region52: #{tpu_custom_call.1} parent=5 // pred_fallthru
        _
    $region6: #{tpu_custom_call.1} parent=1 // loop_footer
      %s20 = sadd.s32 1, %s16
    $region7: #{tpu_custom_call.1} parent=1 // loop_footer_branch
      %15 = sbr.rel target = $region3
    $region8: #{tpu_custom_call.1} parent=1 // loop_exit
      _
    %423 = vsyncpa [#allocation3], 1
    %s424 = scalar_lea.sflag [#allocation3], 1
    %425 = vsyncpa %s424, 1
    %426 = vsyncpa [#allocation6], 1
    %427 = vsyncpa [#allocation4], 1
    %s428 = scalar_lea.sflag [#allocation4], 1
    %429 = vsyncpa %s428, 1

// kernel: tpu_custom_call.1
$region0: #{tpu_custom_call.1}
  #allocation0 [shape = 'u32[]', space=smem, size = 0x4, offset = 0x4, fixed_abs, tag = 'smem constant byte address 0x4 - core index']
  #allocation1 [shape = 'u32[72,128]{1,0:T(1,128)}', space=vmem, size = 0x9000, scoped, tag = 'internal scratch']
  %s0 = inlined_call_operand.hbm [shape: f32[2,8,32], index: 0, kind: input, shape index: {}]
  %s1 = inlined_call_operand.hbm [shape: f32[32,32], index: 1, kind: input, shape index: {}]
  %s2 = inlined_call_operand.hbm [shape: f32[32,32], index: 2, kind: input, shape index: {}]
  %s3 = inlined_call_operand.hbm [shape: f32[2,8,32], index: 3, kind: output, shape index: {}]
  %s4 = sld [smem:[#allocation0]]
  $region57: #{tpu_custom_call.1} parent=0
    _
  %s6 = ssub.s32 1, %s4
  %s7 = scalar_select 0, %s6, %s4
  $region1: #{tpu_custom_call.1} parent=0
    #allocation2 [shape = 'u8[8192]{0}', space=vmem, size = 0x2000, scoped, tag = 'input window, operand 0']
    #allocation3 [shape = 's32[2]{0}', space=sflag, size = 0x8, scoped, tag = 'scoped memory for tpu_custom_call.1']
    #allocation4 [shape = 's32[2]{0}', space=sflag, size = 0x8, scoped, tag = 'scoped memory for tpu_custom_call.1']
    #allocation5 [shape = 'u8[16384]{0}', space=vmem, size = 0x4000, scoped, tag = 'input window, operand 1, single buffered']
    #allocation6 [shape = 's32[1]{0}', space=sflag, size = 0x4, scoped, tag = 'scoped memory for tpu_custom_call.1']
    #allocation7 [shape = 'u8[16384]{0}', space=vmem, size = 0x4000, scoped, tag = 'input window, operand 2, single buffered']
    #allocation8 [shape = 'u8[8192]{0}', space=vmem, size = 0x2000, scoped, tag = 'output window, operand 0']
    %8 = vsyncpa [#allocation3], 0
    %s9 = scalar_lea.sflag [#allocation3], 1
    %10 = vsyncpa %s9, 0
    %11 = vsyncpa [#allocation6], 0
    %12 = vsyncpa [#allocation4], 0
    %s13 = scalar_lea.sflag [#allocation4], 1
    %14 = vsyncpa %s13, 0
    loop: start=0, step=1, limit=4
    $region2: #{tpu_custom_call.1} parent=1 // loop_pre_header
      _
    $region3: #{tpu_custom_call.1} parent=1 // loop_header
      %s16 = sphi 0, %s20
      %p17 = scmp.ge.s32.totalorder %s16, 4
      %s26 = sphi 0, %s28
      %s29 = sphi 0, %s26
      %s30 = sphi 0, %s29
      %s46 = sphi 0, %s30
      %s50 = sphi 0, %s50
      %s52 = sphi 0, %s50
      %s53 = sphi 0, %s52
      %s67 = sphi 0, %s53
      %s71 = sphi 0, %s71
      %s73 = sphi 0, %s71
      %s74 = sphi 0, %s73
      %s88 = sphi 0, %s74
      %s94 = sphi 0, %s96
      %s97 = sphi 0, %s94
      %s98 = sphi 0, %s97
      %s114 = sphi 0, %s98
    $region4: #{tpu_custom_call.1} parent=1 // loop_header_branch
      %19 = sbr.rel (%p17) target = $region8
    $region5: #{tpu_custom_call.1} parent=1 // loop_body
      %s21 = ssub.s32 %s16, 1
      %s22 = ssub.s32 %s16, 2
      %s23 = sadd.s32 %s16, 1
      %s24 = ssub.s32 %s16, %s23
      %p25 = scmp.eq.s32.totalorder %s24, 0
      %s27 = sadd.s32 %s26, 1
      %s28 = scalar_select %p25, %s26, %s27
      %p31 = pneg %p25
      %p32 = scmp.eq.s32.totalorder %s16, 1
      %p33 = por %p31, %p32
      %p34 = scmp.ne.s32.totalorder %s26, %s29
      %p35 = scmp.eq.s32.totalorder %s16, 0
      %p36 = por %p34, %p35
      %p37 = scmp.ne.s32.totalorder %s26, %s29
      %p38 = scmp.eq.s32.totalorder %s21, 1
      %p39 = por %p37, %p38
      %p40 = scmp.ne.s32.totalorder %s29, %s30
      %p41 = scmp.eq.s32.totalorder %s21, 0
      %p42 = por %p40, %p41
      %p43 = scmp.ne.s32.totalorder %s29, %s30
      %p44 = scmp.eq.s32.totalorder %s22, 1
      %p45 = por %p43, %p44
      %p47 = scmp.ne.s32.totalorder %s30, %s46
      %p48 = scmp.eq.s32.totalorder %s22, 0
      %p49 = por %p47, %p48
      %s51 = sadd.s32 %s50, 1
      %p54 = scmp.eq.s32.totalorder %s16, 1
      %p55 = scmp.ne.s32.totalorder %s50, %s52
      %p56 = scmp.eq.s32.totalorder %s16, 0
      %p57 = por %p55, %p56
      %p58 = scmp.ne.s32.totalorder %s50, %s52
      %p59 = scmp.eq.s32.totalorder %s21, 1
      %p60 = por %p58, %p59
      %p61 = scmp.ne.s32.totalorder %s52, %s53
      %p62 = scmp.eq.s32.totalorder %s21, 0
      %p63 = por %p61, %p62
      %p64 = scmp.ne.s32.totalorder %s52, %s53
      %p65 = scmp.eq.s32.totalorder %s22, 1
      %p66 = por %p64, %p65
      %p68 = scmp.ne.s32.totalorder %s53, %s67
      %p69 = scmp.eq.s32.totalorder %s22, 0
      %p70 = por %p68, %p69
      %s72 = sadd.s32 %s71, 1
      %p75 = scmp.eq.s32.totalorder %s16, 1
      %p76 = scmp.ne.s32.totalorder %s71, %s73
      %p77 = scmp.eq.s32.totalorder %s16, 0
      %p78 = por %p76, %p77
      %p79 = scmp.ne.s32.totalorder %s71, %s73
      %p80 = scmp.eq.s32.totalorder %s21, 1
      %p81 = por %p79, %p80
      %p82 = scmp.ne.s32.totalorder %s73, %s74
      %p83 = scmp.eq.s32.totalorder %s21, 0
      %p84 = por %p82, %p83
      %p85 = scmp.ne.s32.totalorder %s73, %s74
      %p86 = scmp.eq.s32.totalorder %s22, 1
      %p87 = por %p85, %p86
      %p89 = scmp.ne.s32.totalorder %s74, %s88
      %p90 = scmp.eq.s32.totalorder %s22, 0
      %p91 = por %p89, %p90
      %s92 = ssub.s32 %s16, %s23
      %p93 = scmp.eq.s32.totalorder %s92, 0
      %s95 = sadd.s32 %s94, 1
      %s96 = scalar_select %p93, %s94, %s95
      %p99 = pneg %p93
      %p100 = scmp.eq.s32.totalorder %s16, 1
      %p101 = por %p99, %p100
      %p102 = scmp.ne.s32.totalorder %s94, %s97
      %p103 = scmp.eq.s32.totalorder %s16, 0
      %p104 = por %p102, %p103
      %p105 = scmp.ne.s32.totalorder %s94, %s97
      %p106 = scmp.eq.s32.totalorder %s21, 1
      %p107 = por %p105, %p106
      %p108 = scmp.ne.s32.totalorder %s97, %s98
      %p109 = scmp.eq.s32.totalorder %s21, 0
      %p110 = por %p108, %p109
      %p111 = scmp.ne.s32.totalorder %s97, %s98
      %p112 = scmp.eq.s32.totalorder %s22, 1
      %p113 = por %p111, %p112
      %p115 = scmp.ne.s32.totalorder %s98, %s114
      %p116 = scmp.eq.s32.totalorder %s22, 0
      %p117 = por %p115, %p116
      %p118 = scmp.le.s32.totalorder 1, %s16
      %p119 = scmp.lt.s32.totalorder %s16, 3
      %p120 = pnand %p118, %p119
      %p121 = pneg %p120
      // Predicated region
      $region9: #{tpu_custom_call.1} parent=5 // pred_check
        _
      $region10: #{tpu_custom_call.1} parent=5 // pred_check_branch
        %123 = sbr.rel (%p120) target = $region12
      $region11: #{tpu_custom_call.1} parent=5 // pred_region
        %s124 = ssub.s32 %s16, 1
        // Predicated region
        $region13: #{tpu_custom_call.1} parent=11 // pred_check
          %p125 = pneg %p63
        $region14: #{tpu_custom_call.1} parent=11 // pred_check_branch
          %127 = sbr.rel (%p125) target = $region16
        $region15: #{tpu_custom_call.1} parent=11 // pred_region
          %129 = vsyncadd [#allocation6], 0
          %s130 = sshll.u32 %s1, 4
          %s131 = int_to_ptr.hbm [resolvable:$true] %s130
          %s132 = sshll.u32 [#allocation5], 4
          %s133 = int_to_ptr.vmem [resolvable:$true] %s132
          %138 = dma.hbm_to_vmem [thread:$0]  %s131, 512, %s133, [#allocation6], 128, 128, 8
        $region16: #{tpu_custom_call.1} parent=11 // pred_fallthru
          _
        // Predicated region
        $region17: #{tpu_custom_call.1} parent=11 // pred_check
          %p139 = pneg %p84
        $region18: #{tpu_custom_call.1} parent=11 // pred_check_branch
          %141 = sbr.rel (%p139) target = $region20
        $region19: #{tpu_custom_call.1} parent=11 // pred_region
          %143 = vsyncadd [#allocation6], 0
          %s144 = sshll.u32 %s2, 4
          %s145 = int_to_ptr.hbm [resolvable:$true] %s144
          %s146 = sshll.u32 [#allocation7], 4
          %s147 = int_to_ptr.vmem [resolvable:$true] %s146
          %152 = dma.hbm_to_vmem [thread:$0]  %s145, 512, %s147, [#allocation6], 128, 128, 8
        $region20: #{tpu_custom_call.1} parent=11 // pred_fallthru
          _
      $region12: #{tpu_custom_call.1} parent=5 // pred_fallthru
        _
      %p153 = scmp.lt.s32.totalorder %s16, 2
      // Predicated region
      $region21: #{tpu_custom_call.1} parent=5 // pred_check
        %p154 = pneg %p153
      $region22: #{tpu_custom_call.1} parent=5 // pred_check_branch
        %156 = sbr.rel (%p154) target = $region24
      $region23: #{tpu_custom_call.1} parent=5 // pred_region
        // Predicated region
        $region25: #{tpu_custom_call.1} parent=23 // pred_check
          %p157 = pneg %p36
        $region26: #{tpu_custom_call.1} parent=23 // pred_check_branch
          %159 = sbr.rel (%p157) target = $region28
        $region27: #{tpu_custom_call.1} parent=23 // pred_region
          %s160 = sand.u32 %s26, 1
          %s161 = scalar_lea.sflag [#allocation3], %s160
          %s162 = sand.u32 %s26, 1
          %s163 = smul.addr %s162, 8
          %s164 = scalar_lea.vmem [#allocation2], %s163
          %166 = vsyncadd %s161, 0
          %s167 = smul.addr %s16, 8
          %s168 = scalar_lea.hbm %s0, %s167
          %s170 = sshll.u32 %s168, 4
          %s171 = int_to_ptr.hbm [resolvable:$true] %s170
          %s172 = sshll.u32 %s164, 4
          %s173 = int_to_ptr.vmem [resolvable:$true] %s172
          %175 = dma.hbm_to_vmem [thread:$0]  %s171, 128, %s173, %s161
        $region28: #{tpu_custom_call.1} parent=23 // pred_fallthru
          _
      $region24: #{tpu_custom_call.1} parent=5 // pred_fallthru
        _
      %p176 = scmp.le.s32.totalorder 1, %s16
      %p177 = scmp.lt.s32.totalorder %s16, 3
      %p178 = pnand %p176, %p177
      %p179 = pneg %p178
      // Predicated region
      $region29: #{tpu_custom_call.1} parent=5 // pred_check
        _
      $region30: #{tpu_custom_call.1} parent=5 // pred_check_branch
        %181 = sbr.rel (%p178) target = $region32
      $region31: #{tpu_custom_call.1} parent=5 // pred_region
        %s182 = ssub.s32 %s16, 1
        %s183 = sand.u32 %s29, 1
        %s184 = scalar_lea.sflag [#allocation3], %s183
        %s185 = sand.u32 %s29, 1
        %s186 = smul.addr %s185, 8
        %s187 = scalar_lea.vmem [#allocation2], %s186
        // Predicated region
        $region33: #{tpu_custom_call.1} parent=31 // pred_check
          %p188 = pneg %p42
        $region34: #{tpu_custom_call.1} parent=31 // pred_check_branch
          %190 = sbr.rel (%p188) target = $region36
        $region35: #{tpu_custom_call.1} parent=31 // pred_region
          %192 = dma.done %s184, 128
        $region36: #{tpu_custom_call.1} parent=31 // pred_fallthru
          _
        // Predicated region
        $region37: #{tpu_custom_call.1} parent=31 // pred_check
          %p193 = pneg %p63
        $region38: #{tpu_custom_call.1} parent=31 // pred_check_branch
          %195 = sbr.rel (%p193) target = $region40
        $region39: #{tpu_custom_call.1} parent=31 // pred_region
          %197 = dma.done [#allocation6], 512
        $region40: #{tpu_custom_call.1} parent=31 // pred_fallthru
          _
        // Predicated region
        $region41: #{tpu_custom_call.1} parent=31 // pred_check
          %p198 = pneg %p84
        $region42: #{tpu_custom_call.1} parent=31 // pred_check_branch
          %200 = sbr.rel (%p198) target = $region44
        $region43: #{tpu_custom_call.1} parent=31 // pred_region
          %202 = dma.done [#allocation6], 512
        $region44: #{tpu_custom_call.1} parent=31 // pred_fallthru
          _
        %s203 = sand.u32 %s29, 1
        %s204 = scalar_lea.sflag [#allocation3], %s203
        %s205 = sand.u32 %s29, 1
        %s206 = smul.addr %s205, 8
        %s207 = scalar_lea.vmem [#allocation2], %s206
        %p208 = pneg %p42
        %p209 = pneg %p39
        %p210 = pneg %p63
        %p211 = pneg %p60
        %p212 = pneg %p84
        %p213 = pneg %p81
        %p214 = pneg %p110
        %p215 = pneg %p107
        %s216 = sand.u32 %s97, 1
        %s217 = scalar_lea.sflag [#allocation4], %s216
        %s218 = sand.u32 %s97, 1
        %s219 = smul.addr %s218, 8
        %s220 = scalar_lea.vmem [#allocation8], %s219
        %v221 = vld [vmem:[%s187] sm:$0xff]
        %v222 = vld [vmem:[#allocation5] sm:$0xff]
        %v223 = vld [vmem:[#allocation5 + $0x8] sm:$0xff]
        %v224 = vld [vmem:[#allocation5 + $0x10] sm:$0xff]
        %v225 = vld [vmem:[#allocation5 + $0x18] sm:$0xff]
        %v226 = vld [vmem:[#allocation7] sm:$0xff]
        %v227 = vld [vmem:[#allocation7 + $0x8] sm:$0xff]
        %v228 = vld [vmem:[#allocation7 + $0x10] sm:$0xff]
        %v229 = vld [vmem:[#allocation7 + $0x18] sm:$0xff]
        %vm230 = vcmask 261120
        %v232 = vsel %vm230, %v221, 0
        %234 = vmatpush.msra.mxu0 0.0
        %235 = vmatpush.msra.mxu0 0.0
        %236 = vmatpush.msra.mxu0 0.0
        %237 = vmatpush.msra.mxu0 0.0
        %238 = vmatpush.msra.mxu0 0.0
        %239 = vmatpush.msra.mxu0 0.0
        %240 = vmatpush.msra.mxu0 0.0
        %241 = vmatpush.msra.mxu0 0.0
        %242 = vmatpush.msra.mxu0 0.0
        %243 = vmatpush.msra.mxu0 0.0
        %244 = vmatpush.msra.mxu0 0.0
        %245 = vmatpush.msra.mxu0 0.0
        %246 = vmatpush.msra.mxu0 %v225
        %247 = vmatpush.msra.mxu0 %v224
        %248 = vmatpush.msra.mxu0 %v223
        %249 = vmatpush.msra.mxu0 %v222
        %250 = vmatmul.f32.gmra.mxu0 %v232
        %v251 = vpop.f32.mrf.mxu0
        %v252 = vadd.f32 0.0, %v251
        %253 = vdwg.mxu0
        %254 = vmatpush.msra.mxu0 0.0
        %255 = vmatpush.msra.mxu0 0.0
        %256 = vmatpush.msra.mxu0 0.0
        %257 = vmatpush.msra.mxu0 0.0
        %258 = vmatpush.msra.mxu0 0.0
        %259 = vmatpush.msra.mxu0 0.0
        %260 = vmatpush.msra.mxu0 0.0
        %261 = vmatpush.msra.mxu0 0.0
        %262 = vmatpush.msra.mxu0 0.0
        %263 = vmatpush.msra.mxu0 0.0
        %264 = vmatpush.msra.mxu0 0.0
        %265 = vmatpush.msra.mxu0 0.0
        %266 = vmatpush.msra.mxu0 %v229
        %267 = vmatpush.msra.mxu0 %v228
        %268 = vmatpush.msra.mxu0 %v227
        %269 = vmatpush.msra.mxu0 %v226
        %270 = vmatmul.f32.gmra.mxu0 %v232
        %v271 = vpop.f32.mrf.mxu0
        %v272 = vadd.f32 0.0, %v271
        %273 = vdwg.mxu0
        %v274 = vsel %vm230, %v252, 0.0
        %v275 = vrot.slane %v274, 4
        %v276 = vadd.f32 %v274, %v275
        %v277 = vrot.slane %v276, 2
        %v278 = vadd.f32 %v276, %v277
        %v279 = vrot.slane %v278, 1
        %v280 = vadd.f32 %v278, %v279
        %v281 = vrcp.pop 8.0
        %v282 = vmul.f32 8.0, %v281
        %v283 = vsub.f32 1.0, %v282
        %v284 = vmul.f32 %v281, %v283
        %v285 = vadd.f32 %v281, %v284
        %vm286 = vweird.f32 %v281
        %v287 = vsel %vm286, %v281, %v285
        %v288 = vmul.f32 %v280, %v287
        %289 = vxpose.xlu0.b32.start [1/16] %v272, 128
        %290 = vxpose.xlu0.b32.cont [2/16] 0.0, 128
        %291 = vxpose.xlu0.b32.cont [3/16] 0.0, 128
        %292 = vxpose.xlu0.b32.cont [4/16] 0.0, 128
        %293 = vxpose.xlu0.b32.cont [5/16] 0.0, 128
        %294 = vxpose.xlu0.b32.cont [6/16] 0.0, 128
        %295 = vxpose.xlu0.b32.cont [7/16] 0.0, 128
        %296 = vxpose.xlu0.b32.cont [8/16] 0.0, 128
        %297 = vxpose.xlu0.b32.cont [9/16] 0.0, 128
        %298 = vxpose.xlu0.b32.cont [10/16] 0.0, 128
        %299 = vxpose.xlu0.b32.cont [11/16] 0.0, 128
        %300 = vxpose.xlu0.b32.cont [12/16] 0.0, 128
        %301 = vxpose.xlu0.b32.cont [13/16] 0.0, 128
        %302 = vxpose.xlu0.b32.cont [14/16] 0.0, 128
        %303 = vxpose.xlu0.b32.cont [15/16] 0.0, 128
        %304 = vxpose.xlu0.b32.end [16/16] 0.0, 128
        %v305 = vpop.trf.xlu0
        %v306 = vpop.trf.xlu0
        %v307 = vpop.trf.xlu0
        %v308 = vpop.trf.xlu0
        %v309 = vpop.trf.xlu0
        %v310 = vpop.trf.xlu0
        %v311 = vpop.trf.xlu0
        %v312 = vpop.trf.xlu0
        %v313 = vpop.trf.xlu0
        %v314 = vpop.trf.xlu0
        %v315 = vpop.trf.xlu0
        %v316 = vpop.trf.xlu0
        %v317 = vpop.trf.xlu0
        %v318 = vpop.trf.xlu0
        %v319 = vpop.trf.xlu0
        %v320 = vpop.trf.xlu0
        %vm321 = vcmask 64512
        %v323 = vsel %vm321, %v305, 0
        %v326 = vsel %vm321, %v306, 0
        %v329 = vsel %vm321, %v307, 0
        %v332 = vsel %vm321, %v308, 0
        %334 = vmatpush.msra.mxu0 0.0
        %335 = vmatpush.msra.mxu0 0.0
        %336 = vmatpush.msra.mxu0 0.0
        %337 = vmatpush.msra.mxu0 0.0
        %338 = vmatpush.msra.mxu0 0.0
        %339 = vmatpush.msra.mxu0 0.0
        %340 = vmatpush.msra.mxu0 0.0
        %341 = vmatpush.msra.mxu0 0.0
        %342 = vmatpush.msra.mxu0 0.0
        %343 = vmatpush.msra.mxu0 0.0
        %344 = vmatpush.msra.mxu0 0.0
        %345 = vmatpush.msra.mxu0 0.0
        %346 = vmatpush.msra.mxu0 0.0
        %347 = vmatpush.msra.mxu0 0.0
        %348 = vmatpush.msra.mxu0 0.0
        %349 = vmatpush.msra.mxu0 %v252
        %350 = vmatmul.f32.gmra.mxu0 %v323
        %v351 = vpop.f32.mrf.mxu0
        %v352 = vadd.f32 0.0, %v351
        %353 = vmatmul.f32.gmra.mxu0 %v326
        %v354 = vpop.f32.mrf.mxu0
        %v355 = vadd.f32 0.0, %v354
        %356 = vmatmul.f32.gmra.mxu0 %v329
        %v357 = vpop.f32.mrf.mxu0
        %v358 = vadd.f32 0.0, %v357
        %359 = vmatmul.f32.gmra.mxu0 %v332
        %v360 = vpop.f32.mrf.mxu0
        %v361 = vadd.f32 0.0, %v360
        %362 = vdwg.mxu0
        %v363 = vmul.f32 %v352, 0.022097087
        %v364 = vmul.f32 %v355, 0.022097087
        %v365 = vmul.f32 %v358, 0.022097087
        %v366 = vmul.f32 %v361, 0.022097087
        %367 = vmatpush.msra.mxu0 0.0
        %368 = vmatpush.msra.mxu0 0.0
        %369 = vmatpush.msra.mxu0 0.0
        %370 = vmatpush.msra.mxu0 0.0
        %371 = vmatpush.msra.mxu0 0.0
        %372 = vmatpush.msra.mxu0 0.0
        %373 = vmatpush.msra.mxu0 0.0
        %374 = vmatpush.msra.mxu0 0.0
        %375 = vmatpush.msra.mxu0 0.0
        %376 = vmatpush.msra.mxu0 0.0
        %377 = vmatpush.msra.mxu0 0.0
        %378 = vmatpush.msra.mxu0 0.0
        %379 = vmatpush.msra.mxu0 %v366
        %380 = vmatpush.msra.mxu0 %v365
        %381 = vmatpush.msra.mxu0 %v364
        %382 = vmatpush.msra.mxu0 %v363
        %383 = vmatmul.f32.gmra.mxu0 %v232
        %v384 = vpop.f32.mrf.mxu0
        %v385 = vadd.f32 0.0, %v384
        %386 = vdwg.mxu0
        %v387 = vadd.f32 %v288, %v385
        %388 = vst.msk [vmem:[%s220] sm:$0xff] %vm230, %v387
        %s389 = sand.u32 %s97, 1
        %s390 = scalar_lea.sflag [#allocation4], %s389
        %s391 = sand.u32 %s97, 1
        %s392 = smul.addr %s391, 8
        %s393 = scalar_lea.vmem [#allocation8], %s392
        // Predicated region
        $region45: #{tpu_custom_call.1} parent=31 // pred_check
          %p394 = pneg %p107
        $region46: #{tpu_custom_call.1} parent=31 // pred_check_branch
          %396 = sbr.rel (%p394) target = $region48
        $region47: #{tpu_custom_call.1} parent=31 // pred_region
          %398 = vsyncadd %s390, 0
          %s399 = smul.addr %s21, 8
          %s400 = scalar_lea.hbm %s3, %s399
          %s402 = sshll.u32 %s393, 4
          %s403 = int_to_ptr.vmem [resolvable:$true] %s402
          %s404 = sshll.u32 %s400, 4
          %s405 = int_to_ptr.hbm [resolvable:$true] %s404
          %407 = dma.vmem_to_hbm [thread:$0]  %s403, 128, %s405, %s390
        $region48: #{tpu_custom_call.1} parent=31 // pred_fallthru
          _
      $region32: #{tpu_custom_call.1} parent=5 // pred_fallthru
        _
      %p408 = scmp.le.s32.totalorder 2, %s16
      // Predicated region
      $region49: #{tpu_custom_call.1} parent=5 // pred_check
        %p409 = pneg %p408
      $region50: #{tpu_custom_call.1} parent=5 // pred_check_branch
        %411 = sbr.rel (%p409) target = $region52
      $region51: #{tpu_custom_call.1} parent=5 // pred_region
        %s412 = ssub.s32 %s16, 2
        // Predicated region
        $region53: #{tpu_custom_call.1} parent=51 // pred_check
          %p413 = pneg %p113
        $region54: #{tpu_custom_call.1} parent=51 // pred_check_branch
          %415 = sbr.rel (%p413) target = $region56
        $region55: #{tpu_custom_call.1} parent=51 // pred_region
          %s416 = sand.u32 %s98, 1
          %s417 = scalar_lea.sflag [#allocation4], %s416
          %s418 = sand.u32 %s98, 1
          %s419 = smul.addr %s418, 8
          %s420 = scalar_lea.vmem [#allocation8], %s419
          %422 = dma.done %s417, 128
        $region56: #{tpu_custom_call.1} parent=51 // pred_fallthru
          _
      $region52: #{tpu_custom_call.1} parent=5 // pred_fallthru
        _
    $region6: #{tpu_custom_call.1} parent=1 // loop_footer
      %s20 = sadd.s32 1, %s16
    $region7: #{tpu_custom_call.1} parent=1 // loop_footer_branch
      %15 = sbr.rel target = $region3
    $region8: #{tpu_custom_call.1} parent=1 // loop_exit
      _
    %423 = vsyncpa [#allocation3], 1
    %s424 = scalar_lea.sflag [#allocation3], 1
    %425 = vsyncpa %s424, 1
    %426 = vsyncpa [#allocation6], 1
    %427 = vsyncpa [#allocation4], 1
    %s428 = scalar_lea.sflag [#allocation4], 1
    %429 = vsyncpa %s428, 1

</llo_original>
